<compile_context>
chip_gen: v7x
topology: tpu7x:2x2x1
jax: 0.10.0
libtpu: 0.0.40
codegen_flags: <defaults>
</compile_context>

<pallas_src>
import functools

import jax
import jax.numpy as jnp
from jax.experimental import pallas as pl
from jax.experimental.pallas import tpu as pltpu

FEAT = 128        # feature trunk width
HID = 64          # per-stream hidden width (value / advantage)


def _round_up(n, m):
    return (n + m - 1) // m * m


def dueling_q_kernel(x_ref, w1_ref, ws1_ref, ws2_ref, bias_ref, out_ref,
                     *, compute_dtype):
    """One batch tile of the whole Dueling-DQN forward.

    h   = relu(x @ W1 + b1)                  (TB, 128)
    hs  = relu(h @ [wv1|wa1] + [bv1|ba1])    (TB, 128)  [:, :64]=value, [:, 64:]=adv
    y   = hs @ Ws2 + bs2                     (TB, 128)  cols 0..A-1 = q-values, rest 0
    """
    b1 = bias_ref[0:1, :]     # (1, 128)
    bs1 = bias_ref[1:2, :]    # (1, 128)
    bs2 = bias_ref[2:3, :]    # (1, 128)  (zero past column num_actions)

    # feature trunk (f32 accumulate, f32 bias/relu; cast operands only for MXU)
    h = jnp.dot(x_ref[...], w1_ref[...], preferred_element_type=jnp.float32) + b1
    h = jnp.maximum(h, 0.0).astype(compute_dtype)

    # fused value+advantage hidden layer (one MXU push instead of two)
    hs = jnp.dot(h, ws1_ref[...], preferred_element_type=jnp.float32) + bs1
    hs = jnp.maximum(hs, 0.0).astype(compute_dtype)

    # fused second layer: the dueling combine is baked into ws2/bs2, so this is
    # directly the Q-value slab. Epilogue = cast + lane-dense store.
    y = jnp.dot(hs, ws2_ref[...], preferred_element_type=jnp.float32) + bs2
    out_ref[...] = y.astype(out_ref.dtype)


def _choose_batch_tile(B, tile_b):
    """Near-even batch split: avoids pathological padding and gives v7x's two
    TensorCores >=1 tile each for moderate/large batches."""
    n_tiles = pl.cdiv(B, tile_b)
    if B >= 128:
        n_tiles = max(n_tiles, 2)          # megacore sharding on v7x
    return _round_up(pl.cdiv(B, n_tiles), 8)


@functools.partial(jax.jit, static_argnames=("num_actions", "tile_b"))
def dueling_q_forward(x, fused_params, num_actions, *, tile_b=1024):
    """Run the fused Dueling-DQN forward. Returns (B, num_actions) f32.

    Compute dtype follows the (pre-cast) weight dtype from fuse_params."""
    w1, ws1, ws2, bias_pack = fused_params
    B, in_dim = x.shape
    compute_dtype = w1.dtype

    tb = _choose_batch_tile(B, tile_b)
    bp = _round_up(B, tb)
    x = x.astype(compute_dtype)
    if bp != B:
        x = jnp.pad(x, ((0, bp - B), (0, 0)))
    grid = (bp // tb,)

    kernel = functools.partial(dueling_q_kernel, compute_dtype=compute_dtype)

    y = pl.pallas_call(
        kernel,
        # Lane-dense (bp, 128) output slab; sliced to num_actions below.
        out_shape=jax.ShapeDtypeStruct((bp, FEAT), jnp.float32),
        grid=grid,
        in_specs=[
            pl.BlockSpec((tb, in_dim), lambda i: (i, 0)),      # x: streamed per tile
            pl.BlockSpec((in_dim, FEAT), lambda i: (0, 0)),    # W1: VMEM-resident
            pl.BlockSpec((FEAT, FEAT), lambda i: (0, 0)),      # fused stream-1 weight
            pl.BlockSpec((FEAT, FEAT), lambda i: (0, 0)),      # fused stream-2 weight
            pl.BlockSpec((8, FEAT), lambda i: (0, 0)),         # packed biases (f32)
        ],
        out_specs=pl.BlockSpec((tb, FEAT), lambda i: (i, 0)),
        compiler_params=pltpu.CompilerParams(
            dimension_semantics=("parallel",)),                 # megacore on v7x
    )(x, w1, ws1, ws2, bias_pack)
    return y[:B, :num_actions]


def init_params(key, input_size, output_size):
    """Deterministic synthetic weights. Shapes mirror the PyTorch module,
    with Linear weights stored transposed as (in_features, out_features)."""
    ks = jax.random.split(key, 10)

    def lin(kw, kb, fan_in, fan_out):
        bound = 1.0 / jnp.sqrt(jnp.float32(fan_in))
        w = jax.random.uniform(kw, (fan_in, fan_out), jnp.float32, -bound, bound)
        b = jax.random.uniform(kb, (1, fan_out), jnp.float32, -bound, bound)
        return w, b

    w1, b1 = lin(ks[0], ks[1], input_size, FEAT)
    wv1, bv1 = lin(ks[2], ks[3], FEAT, HID)
    wv2, bv2 = lin(ks[4], ks[5], HID, 1)
    wa1, ba1 = lin(ks[6], ks[7], FEAT, HID)
    wa2, ba2 = lin(ks[8], ks[9], HID, output_size)
    return (w1, b1, wv1, bv1, wv2, bv2, wa1, ba1, wa2, ba2)


def fuse_params(params, num_actions, *, use_bf16=True):
    """Build the fused weights consumed by the kernel (done once, offline).

    The dueling combine v + a - mean(a) is folded entirely into ws2/bs2.
    With use_bf16=True the matmul weights are pre-cast offline (biases stay f32)."""
    (w1, b1, wv1, bv1, wv2, bv2, wa1, ba1, wa2, ba2) = params
    A = num_actions
    assert A <= FEAT, f"num_actions={A} must be <= {FEAT}"

    # Stream-1: [value hidden | advantage hidden] side by side.
    ws1 = jnp.concatenate([wv1, wa1], axis=1)                 # (128, 128)
    bs1 = jnp.concatenate([bv1, ba1], axis=1)                 # (1, 128)

    # Stream-2 with the dueling combine folded in (lane-padded to 128 cols):
    #   q[:, j] = hs_val @ wv2 + hs_adv @ (wa2[:, j] - mean_k wa2[:, k])
    #             + ba2[j] + bv2 - mean(ba2)
    ws2 = jnp.zeros((FEAT, FEAT), jnp.float32)
    ws2 = ws2.at[:HID, :A].set(jnp.broadcast_to(wv2, (HID, A)))
    ws2 = ws2.at[HID:, :A].set(wa2 - jnp.mean(wa2, axis=1, keepdims=True))

    bs2 = jnp.zeros((1, FEAT), jnp.float32)
    bs2 = bs2.at[0, :A].set(ba2[0] + bv2[0, 0] - jnp.mean(ba2))

    # Packed biases, padded to the native (8,128) sublane tile.
    bias_pack = jnp.zeros((8, FEAT), jnp.float32)
    bias_pack = bias_pack.at[0].set(b1[0])
    bias_pack = bias_pack.at[1].set(bs1[0])
    bias_pack = bias_pack.at[2].set(bs2[0])

    w_dtype = jnp.bfloat16 if use_bf16 else jnp.float32
    return (w1.astype(w_dtype), ws1.astype(w_dtype), ws2.astype(w_dtype), bias_pack)


def reference_forward(x, params):
    """Pure-JAX reference matching the PyTorch forward exactly (f32)."""
    (w1, b1, wv1, bv1, wv2, bv2, wa1, ba1, wa2, ba2) = params
    h = jax.nn.relu(x @ w1 + b1)
    v = jax.nn.relu(h @ wv1 + bv1) @ wv2 + bv2
    a = jax.nn.relu(h @ wa1 + ba1) @ wa2 + ba2
    return v + a - a.mean(axis=1, keepdims=True)


if __name__ == "__main__":
    input_size = 16   # observation dim
    output_size = 8   # number of actions

    key = jax.random.PRNGKey(0)
    k_x, k_x2, k_x3, k_p = jax.random.split(key, 4)
    params = init_params(k_p, input_size, output_size)
    fused_f32 = fuse_params(params, output_size, use_bf16=False)
    fused_bf16 = fuse_params(params, output_size, use_bf16=True)

    # TODO(synk): for latency-critical B~8 serving, pin the ~69 KB bf16 weight set in
    #             VMEM across calls via a cross-call prefetch (P10) instead of re-DMAing per step.
    # TODO(synk): on v7x, fp8 weights would halve resident-weight DMA again; gate on DQN accuracy.

    # Small latency-style batch, exact f32 path (single tile, grid=(1,)).
    x = jax.random.normal(k_x, (8, input_size), dtype=jnp.float32)
    out = jax.block_until_ready(dueling_q_forward(x, fused_f32, output_size))
    ref = reference_forward(x, params)
    assert out.shape == (8, output_size), out.shape
    assert jnp.allclose(out, ref, atol=1e-4, rtol=1e-4), (
        float(jnp.max(jnp.abs(out - ref))))

    # Non-multiple batch with a multi-step grid (exercises tiling + padding path), f32.
    x2 = jax.random.normal(k_x2, (40, input_size), dtype=jnp.float32)
    out2 = jax.block_until_ready(
        dueling_q_forward(x2, fused_f32, output_size, tile_b=16))
    ref2 = reference_forward(x2, params)
    assert out2.shape == (40, output_size), out2.shape
    assert jnp.allclose(out2, ref2, atol=1e-4, rtol=1e-4), (
        float(jnp.max(jnp.abs(out2 - ref2))))

    # Default bf16 path on a "training" batch (>=2 grid steps -> both v7x TCs active).
    x3 = jax.random.normal(k_x3, (384, input_size), dtype=jnp.float32)
    out3 = jax.block_until_ready(dueling_q_forward(x3, fused_bf16, output_size))
    ref3 = reference_forward(x3, params)
    assert out3.shape == (384, output_size), out3.shape
    assert jnp.allclose(out3, ref3, atol=5e-2, rtol=5e-2), (
        float(jnp.max(jnp.abs(out3 - ref3))))

    print("KERNEL_OK")
</pallas_src>

<mosaic_0001>
module attributes {stable_mosaic.version = 11 : i64} {
  func.func @dueling_q_kernel(%arg0: i32, %arg1: memref<8x16xf32, #tpu.memory_space<vmem>>, %arg2: memref<16x128xf32, #tpu.memory_space<vmem>>, %arg3: memref<128x128xf32, #tpu.memory_space<vmem>>, %arg4: memref<128x128xf32, #tpu.memory_space<vmem>>, %arg5: memref<8x128xf32, #tpu.memory_space<vmem>>, %arg6: memref<8x128xf32, #tpu.memory_space<vmem>>) attributes {dimension_semantics = [#tpu.dimension_semantics<parallel>], iteration_bounds = array<i64: 1>, scalar_prefetch = 0 : i64, scratch_operands = 0 : i64, tpu.core_type = #tpu.core_type<tc>, window_params = [{transform_indices = @transform_0, window_bounds = array<i64: 8, 16>}, {pipeline_mode = #tpu.pipeline_mode<synchronous>, transform_indices = @transform_1, window_bounds = array<i64: 16, 128>}, {pipeline_mode = #tpu.pipeline_mode<synchronous>, transform_indices = @transform_2, window_bounds = array<i64: 128, 128>}, {pipeline_mode = #tpu.pipeline_mode<synchronous>, transform_indices = @transform_3, window_bounds = array<i64: 128, 128>}, {pipeline_mode = #tpu.pipeline_mode<synchronous>, transform_indices = @transform_4, window_bounds = array<i64: 8, 128>}, {transform_indices = @transform_5, window_bounds = array<i64: 8, 128>}]} {
    %c0 = arith.constant 0 : index
    %c0_0 = arith.constant 0 : index
    %0 = vector.load %arg5[%c0, %c0_0] : memref<8x128xf32, #tpu.memory_space<vmem>>, vector<1x128xf32>
    %c1 = arith.constant 1 : index
    %c0_1 = arith.constant 0 : index
    %1 = vector.load %arg5[%c1, %c0_1] : memref<8x128xf32, #tpu.memory_space<vmem>>, vector<1x128xf32>
    %c2 = arith.constant 2 : index
    %c0_2 = arith.constant 0 : index
    %2 = vector.load %arg5[%c2, %c0_2] : memref<8x128xf32, #tpu.memory_space<vmem>>, vector<1x128xf32>
    %c0_3 = arith.constant 0 : index
    %c0_4 = arith.constant 0 : index
    %3 = vector.load %arg1[%c0_3, %c0_4] : memref<8x16xf32, #tpu.memory_space<vmem>>, vector<8x16xf32>
    %c0_5 = arith.constant 0 : index
    %c0_6 = arith.constant 0 : index
    %4 = vector.load %arg2[%c0_5, %c0_6] : memref<16x128xf32, #tpu.memory_space<vmem>>, vector<16x128xf32>
    %cst = arith.constant dense<0.000000e+00> : vector<8x128xf32>
    %5 = tpu.matmul %3, %4, %cst {dimension_numbers = #tpu.dot_dimension_numbers<[1], [0], [0], [1], [0, 0, 1, 1], [], []>} : vector<8x16xf32>, vector<16x128xf32>, vector<8x128xf32> -> vector<8x128xf32>
    %6 = vector.broadcast %0 : vector<1x128xf32> to vector<8x128xf32>
    %7 = arith.addf %5, %6 : vector<8x128xf32>
    %cst_7 = arith.constant 0.000000e+00 : f32
    %8 = vector.broadcast %cst_7 : f32 to vector<8x128xf32>
    %9 = arith.maximumf %7, %8 : vector<8x128xf32>
    %c0_8 = arith.constant 0 : index
    %c0_9 = arith.constant 0 : index
    %10 = vector.load %arg3[%c0_8, %c0_9] : memref<128x128xf32, #tpu.memory_space<vmem>>, vector<128x128xf32>
    %cst_10 = arith.constant dense<0.000000e+00> : vector<8x128xf32>
    %11 = tpu.matmul %9, %10, %cst_10 {dimension_numbers = #tpu.dot_dimension_numbers<[1], [0], [0], [1], [0, 0, 1, 1], [], []>} : vector<8x128xf32>, vector<128x128xf32>, vector<8x128xf32> -> vector<8x128xf32>
    %12 = vector.broadcast %1 : vector<1x128xf32> to vector<8x128xf32>
    %13 = arith.addf %11, %12 : vector<8x128xf32>
    %cst_11 = arith.constant 0.000000e+00 : f32
    %14 = vector.broadcast %cst_11 : f32 to vector<8x128xf32>
    %15 = arith.maximumf %13, %14 : vector<8x128xf32>
    %c0_12 = arith.constant 0 : index
    %c0_13 = arith.constant 0 : index
    %16 = vector.load %arg4[%c0_12, %c0_13] : memref<128x128xf32, #tpu.memory_space<vmem>>, vector<128x128xf32>
    %cst_14 = arith.constant dense<0.000000e+00> : vector<8x128xf32>
    %17 = tpu.matmul %15, %16, %cst_14 {dimension_numbers = #tpu.dot_dimension_numbers<[1], [0], [0], [1], [0, 0, 1, 1], [], []>} : vector<8x128xf32>, vector<128x128xf32>, vector<8x128xf32> -> vector<8x128xf32>
    %18 = vector.broadcast %2 : vector<1x128xf32> to vector<8x128xf32>
    %19 = arith.addf %17, %18 : vector<8x128xf32>
    %c0_15 = arith.constant 0 : index
    %c0_16 = arith.constant 0 : index
    %20 = vector.load %arg6[%c0_15, %c0_16] : memref<8x128xf32, #tpu.memory_space<vmem>>, vector<8x128xf32>
    tpu.vector_store %arg6[%c0_15, %c0_16], %19 {strides = array<i32>} : memref<8x128xf32, #tpu.memory_space<vmem>>, vector<8x128xf32>,
    return
  }
  func.func @transform_0(%arg0: i32) -> (i32, i32) {
    %c0_i32 = arith.constant 0 : i32
    %c0_i32_0 = arith.constant 0 : i32
    return %arg0, %c0_i32 : i32, i32
  }
  func.func @transform_1(%arg0: i32) -> (i32, i32) {
    %c0_i32 = arith.constant 0 : i32
    %c0_i32_0 = arith.constant 0 : i32
    %c0_i32_1 = arith.constant 0 : i32
    return %c0_i32, %c0_i32_0 : i32, i32
  }
  func.func @transform_2(%arg0: i32) -> (i32, i32) {
    %c0_i32 = arith.constant 0 : i32
    %c0_i32_0 = arith.constant 0 : i32
    %c0_i32_1 = arith.constant 0 : i32
    return %c0_i32, %c0_i32_0 : i32, i32
  }
  func.func @transform_3(%arg0: i32) -> (i32, i32) {
    %c0_i32 = arith.constant 0 : i32
    %c0_i32_0 = arith.constant 0 : i32
    %c0_i32_1 = arith.constant 0 : i32
    return %c0_i32, %c0_i32_0 : i32, i32
  }
  func.func @transform_4(%arg0: i32) -> (i32, i32) {
    %c0_i32 = arith.constant 0 : i32
    %c0_i32_0 = arith.constant 0 : i32
    %c0_i32_1 = arith.constant 0 : i32
    return %c0_i32, %c0_i32_0 : i32, i32
  }
  func.func @transform_5(%arg0: i32) -> (i32, i32) {
    %c0_i32 = arith.constant 0 : i32
    %c0_i32_0 = arith.constant 0 : i32
    return %arg0, %c0_i32 : i32, i32
  }
}

</mosaic_0001>

<llo_original>
// kernel: dueling_q_forward.1
$region0: #{dueling_q_forward.1}
  #allocation0 [shape = 'u32[]', space=smem, size = 0x4, offset = 0x4, fixed_abs, tag = 'smem constant byte address 0x4 - core index']
  #allocation1 [shape = 'u32[144,128]{1,0:T(1,128)}', space=vmem, size = 0x12000, scoped, tag = 'internal scratch']
  %s0 = inlined_call_operand.hbm [shape: f32[8,16], index: 0, kind: input, shape index: {}]
  %s1 = inlined_call_operand.hbm [shape: f32[16,128], index: 1, kind: input, shape index: {}]
  %s2 = inlined_call_operand.hbm [shape: f32[128,128], index: 2, kind: input, shape index: {}]
  %s3 = inlined_call_operand.hbm [shape: f32[128,128], index: 3, kind: input, shape index: {}]
  %s4 = inlined_call_operand.vmem [shape: f32[8,128], index: 4, kind: input, shape index: {}]
  %s5 = inlined_call_operand.hbm [shape: f32[8,128], index: 5, kind: output, shape index: {}]
  %s6 = sld [smem:[#allocation0]]
  $region46: #{dueling_q_forward.1} parent=0
    _
  %s8 = ssub.s32 1, %s6
  %s9 = scalar_select 0, %s8, %s6
  $region1: #{dueling_q_forward.1} parent=0
    #allocation2 [shape = 'u8[4096]{0}', space=vmem, size = 0x1000, scoped, tag = 'input window, operand 0, single buffered']
    #allocation3 [shape = 's32[1]{0}', space=sflag, size = 0x4, scoped, tag = 'scoped memory for dueling_q_forward.1']
    #allocation4 [shape = 's32[1]{0}', space=sflag, size = 0x4, scoped, tag = 'scoped memory for dueling_q_forward.1']
    #allocation5 [shape = 'u8[8192]{0}', space=vmem, size = 0x2000, scoped, tag = 'input window, operand 1, single buffered']
    #allocation6 [shape = 's32[1]{0}', space=sflag, size = 0x4, scoped, tag = 'scoped memory for dueling_q_forward.1']
    #allocation7 [shape = 'u8[65536]{0}', space=vmem, size = 0x10000, scoped, tag = 'input window, operand 2, single buffered']
    #allocation8 [shape = 'u8[65536]{0}', space=vmem, size = 0x10000, scoped, tag = 'input window, operand 3, single buffered']
    #allocation9 [shape = 's32[1]{0}', space=sflag, size = 0x4, scoped, tag = 'scoped memory for dueling_q_forward.1']
    #allocation10 [shape = 'u8[4096]{0}', space=vmem, size = 0x1000, scoped, tag = 'output window, operand 0, single buffered']
    %10 = vsyncpa [#allocation3], 0
    %11 = vsyncpa [#allocation6], 0
    %12 = vsyncpa [#allocation9], 0
    %13 = vsyncpa [#allocation4], 0
    // Predicated region
    $region2: #{dueling_q_forward.1} parent=1 // pred_check
      _
    $region3: #{dueling_q_forward.1} parent=1 // pred_check_branch
      %15 = sbr.rel (0) target = $region5
    $region4: #{dueling_q_forward.1} parent=1 // pred_region
      %s17 = ssub.s32 128, 128
      %18 = vsyncadd [#allocation3], %s17
      %s20 = sshll.u32 [#allocation2], 4
      %s21 = int_to_ptr.vmem [resolvable:$true] %s20
      %23 = dma.hbm_to_vmem [thread:$0]  %s0, 128, %s21, [#allocation3]
    $region5: #{dueling_q_forward.1} parent=1 // pred_fallthru
      _
    // Predicated region
    $region6: #{dueling_q_forward.1} parent=1 // pred_check
      _
    $region7: #{dueling_q_forward.1} parent=1 // pred_check_branch
      %25 = sbr.rel (0) target = $region9
    $region8: #{dueling_q_forward.1} parent=1 // pred_region
      %s27 = ssub.s32 256, 256
      %28 = vsyncadd [#allocation6], %s27
      %s29 = sshll.u32 [#allocation5], 4
      %s30 = int_to_ptr.vmem [resolvable:$true] %s29
      %35 = dma.hbm_to_vmem [thread:$0]  %s1, 256, %s30, [#allocation6], 128, 128, 8
    $region9: #{dueling_q_forward.1} parent=1 // pred_fallthru
      _
    // Predicated region
    $region10: #{dueling_q_forward.1} parent=1 // pred_check
      _
    $region11: #{dueling_q_forward.1} parent=1 // pred_check_branch
      %37 = sbr.rel (0) target = $region13
    $region12: #{dueling_q_forward.1} parent=1 // pred_region
      %s39 = ssub.s32 2048, 2048
      %40 = vsyncadd [#allocation6], %s39
      %s41 = sshll.u32 [#allocation7], 4
      %s42 = int_to_ptr.vmem [resolvable:$true] %s41
      %47 = dma.hbm_to_vmem [thread:$0]  %s2, 2048, %s42, [#allocation6], 128, 128, 8
    $region13: #{dueling_q_forward.1} parent=1 // pred_fallthru
      _
    // Predicated region
    $region14: #{dueling_q_forward.1} parent=1 // pred_check
      _
    $region15: #{dueling_q_forward.1} parent=1 // pred_check_branch
      %49 = sbr.rel (0) target = $region17
    $region16: #{dueling_q_forward.1} parent=1 // pred_region
      %s51 = ssub.s32 2048, 2048
      %52 = vsyncadd [#allocation9], %s51
      %s53 = sshll.u32 [#allocation8], 4
      %s54 = int_to_ptr.vmem [resolvable:$true] %s53
      %59 = dma.hbm_to_vmem [thread:$0]  %s3, 2048, %s54, [#allocation9], 128, 128, 8
    $region17: #{dueling_q_forward.1} parent=1 // pred_fallthru
      _
    // Predicated region
    $region18: #{dueling_q_forward.1} parent=1 // pred_check
      _
    $region19: #{dueling_q_forward.1} parent=1 // pred_check_branch
      %61 = sbr.rel (0) target = $region21
    $region20: #{dueling_q_forward.1} parent=1 // pred_region
      _
    $region21: #{dueling_q_forward.1} parent=1 // pred_fallthru
      _
    // Predicated region
    $region22: #{dueling_q_forward.1} parent=1 // pred_check
      _
    $region23: #{dueling_q_forward.1} parent=1 // pred_check_branch
      %63 = sbr.rel (0) target = $region25
    $region24: #{dueling_q_forward.1} parent=1 // pred_region
      %64 = dma.done [#allocation3], 128
    $region25: #{dueling_q_forward.1} parent=1 // pred_fallthru
      _
    // Predicated region
    $region26: #{dueling_q_forward.1} parent=1 // pred_check
      _
    $region27: #{dueling_q_forward.1} parent=1 // pred_check_branch
      %66 = sbr.rel (0) target = $region29
    $region28: #{dueling_q_forward.1} parent=1 // pred_region
      %67 = dma.done [#allocation6], 256
    $region29: #{dueling_q_forward.1} parent=1 // pred_fallthru
      _
    // Predicated region
    $region30: #{dueling_q_forward.1} parent=1 // pred_check
      _
    $region31: #{dueling_q_forward.1} parent=1 // pred_check_branch
      %69 = sbr.rel (0) target = $region33
    $region32: #{dueling_q_forward.1} parent=1 // pred_region
      %70 = dma.done [#allocation6], 2048
    $region33: #{dueling_q_forward.1} parent=1 // pred_fallthru
      _
    // Predicated region
    $region34: #{dueling_q_forward.1} parent=1 // pred_check
      _
    $region35: #{dueling_q_forward.1} parent=1 // pred_check_branch
      %72 = sbr.rel (0) target = $region37
    $region36: #{dueling_q_forward.1} parent=1 // pred_region
      %73 = dma.done [#allocation9], 2048
    $region37: #{dueling_q_forward.1} parent=1 // pred_fallthru
      _
    %v74 = vld [vmem:[%s4] sm:$0x1]
    %v75 = vld [vmem:[%s4 + $0x1] sm:$0x1]
    %v76 = vld [vmem:[%s4 + $0x2] sm:$0x1]
    %v77 = vld [vmem:[#allocation2] sm:$0xff]
    %v78 = vld [vmem:[#allocation5] sm:$0xff]
    %v79 = vld [vmem:[#allocation5 + $0x8] sm:$0xff]
    %v80 = vlaneseq
    %v81 = vshrl.u32 %v80, 7
    %v82 = vsub.s32 0, %v81
    %v83 = vrot.slane %v74, %v82
    %vm84 = vcmask 130048
    %v86 = vsel %vm84, %v77, 0
    %88 = vmatprep.subr.mxu0 0.0
    %89 = vmatpush1.msra.mxu0 %v78
    %90 = vmatprep.subr.mxu0 0.0
    %91 = vmatpush1.msra.mxu0 %v79
    %92 = vmatprep.subr.mxu0 0.0
    %93 = vmatpush1.msra.mxu0 0.0
    %94 = vmatprep.subr.mxu0 0.0
    %95 = vmatpush1.msra.mxu0 0.0
    %96 = vmatprep.subr.mxu0 0.0
    %97 = vmatpush1.msra.mxu0 0.0
    %98 = vmatprep.subr.mxu0 0.0
    %99 = vmatpush1.msra.mxu0 0.0
    %100 = vmatprep.subr.mxu0 0.0
    %101 = vmatpush1.msra.mxu0 0.0
    %102 = vmatprep.subr.mxu0 0.0
    %103 = vmatpush1.msra.mxu0 0.0
    %104 = vmatprep.subr.mxu0 0.0
    %105 = vmatpush1.msra.mxu0 0.0
    %106 = vmatprep.subr.mxu0 0.0
    %107 = vmatpush1.msra.mxu0 0.0
    %108 = vmatprep.subr.mxu0 0.0
    %109 = vmatpush1.msra.mxu0 0.0
    %110 = vmatprep.subr.mxu0 0.0
    %111 = vmatpush1.msra.mxu0 0.0
    %112 = vmatprep.subr.mxu0 0.0
    %113 = vmatpush1.msra.mxu0 0.0
    %114 = vmatprep.subr.mxu0 0.0
    %115 = vmatpush1.msra.mxu0 0.0
    %116 = vmatprep.subr.mxu0 0.0
    %117 = vmatpush1.msra.mxu0 0.0
    %118 = vmatprep.subr.mxu0 0.0
    %119 = vmatpush1.msra.mxu0 0.0
    %120 = vmatprep.subr.mxu0 0.0
    %121 = vmatpush1.msra.mxu0 0.0
    %122 = vmatprep.subr.mxu0 0.0
    %123 = vmatpush1.msra.mxu0 0.0
    %124 = vmatprep.subr.mxu0 0.0
    %125 = vmatpush1.msra.mxu0 0.0
    %126 = vmatprep.subr.mxu0 0.0
    %127 = vmatpush1.msra.mxu0 0.0
    %128 = vmatprep.subr.mxu0 0.0
    %129 = vmatpush1.msra.mxu0 0.0
    %130 = vmatprep.subr.mxu0 0.0
    %131 = vmatpush1.msra.mxu0 0.0
    %132 = vmatprep.subr.mxu0 0.0
    %133 = vmatpush1.msra.mxu0 0.0
    %134 = vmatprep.subr.mxu0 0.0
    %135 = vmatpush1.msra.mxu0 0.0
    %136 = vmatprep.subr.mxu0 0.0
    %137 = vmatpush1.msra.mxu0 0.0
    %138 = vmatprep.subr.mxu0 0.0
    %139 = vmatpush1.msra.mxu0 0.0
    %140 = vmatprep.subr.mxu0 0.0
    %141 = vmatpush1.msra.mxu0 0.0
    %142 = vmatprep.subr.mxu0 0.0
    %143 = vmatpush1.msra.mxu0 0.0
    %144 = vmatprep.subr.mxu0 0.0
    %145 = vmatpush1.msra.mxu0 0.0
    %146 = vmatprep.subr.mxu0 0.0
    %147 = vmatpush1.msra.mxu0 0.0
    %148 = vmatprep.subr.mxu0 0.0
    %149 = vmatpush1.msra.mxu0 0.0
    %150 = vmatprep.subr.mxu0 0.0
    %151 = vmatpush1.msra.mxu0 0.0
    %152 = vmatprep.mubr.f32.mxu0 0.0
    %153 = vmatmul.mubr.f32.gmra.mrb[0].mxu0 %v86
    %v154 = vpop.f32.mrb[0].mxu0
    %v155 = vadd.f32 %v83, %v154
    %v156 = vpop.f32.mrb[0].mxu0
    %157 = vdwg.mxu0
    %v158 = vmax.f32 %v155, 0.0
    %v159 = vld [vmem:[#allocation7] sm:$0xff]
    %v160 = vld [vmem:[#allocation7 + $0x8] sm:$0xff]
    %v161 = vld [vmem:[#allocation7 + $0x10] sm:$0xff]
    %v162 = vld [vmem:[#allocation7 + $0x18] sm:$0xff]
    %v163 = vld [vmem:[#allocation7 + $0x20] sm:$0xff]
    %v164 = vld [vmem:[#allocation7 + $0x28] sm:$0xff]
    %v165 = vld [vmem:[#allocation7 + $0x30] sm:$0xff]
    %v166 = vld [vmem:[#allocation7 + $0x38] sm:$0xff]
    %v167 = vld [vmem:[#allocation7 + $0x40] sm:$0xff]
    %v168 = vld [vmem:[#allocation7 + $0x48] sm:$0xff]
    %v169 = vld [vmem:[#allocation7 + $0x50] sm:$0xff]
    %v170 = vld [vmem:[#allocation7 + $0x58] sm:$0xff]
    %v171 = vld [vmem:[#allocation7 + $0x60] sm:$0xff]
    %v172 = vld [vmem:[#allocation7 + $0x68] sm:$0xff]
    %v173 = vld [vmem:[#allocation7 + $0x70] sm:$0xff]
    %v174 = vld [vmem:[#allocation7 + $0x78] sm:$0xff]
    %v175 = vlaneseq
    %v176 = vshrl.u32 %v175, 7
    %v177 = vsub.s32 0, %v176
    %v178 = vrot.slane %v75, %v177
    %179 = vmatprep.subr.mxu0 0.0
    %180 = vmatpush1.msra.mxu0 %v159
    %181 = vmatprep.subr.mxu0 0.0
    %182 = vmatpush1.msra.mxu0 %v160
    %183 = vmatprep.subr.mxu0 0.0
    %184 = vmatpush1.msra.mxu0 %v161
    %185 = vmatprep.subr.mxu0 0.0
    %186 = vmatpush1.msra.mxu0 %v162
    %187 = vmatprep.subr.mxu0 0.0
    %188 = vmatpush1.msra.mxu0 %v163
    %189 = vmatprep.subr.mxu0 0.0
    %190 = vmatpush1.msra.mxu0 %v164
    %191 = vmatprep.subr.mxu0 0.0
    %192 = vmatpush1.msra.mxu0 %v165
    %193 = vmatprep.subr.mxu0 0.0
    %194 = vmatpush1.msra.mxu0 %v166
    %195 = vmatprep.subr.mxu0 0.0
    %196 = vmatpush1.msra.mxu0 %v167
    %197 = vmatprep.subr.mxu0 0.0
    %198 = vmatpush1.msra.mxu0 %v168
    %199 = vmatprep.subr.mxu0 0.0
    %200 = vmatpush1.msra.mxu0 %v169
    %201 = vmatprep.subr.mxu0 0.0
    %202 = vmatpush1.msra.mxu0 %v170
    %203 = vmatprep.subr.mxu0 0.0
    %204 = vmatpush1.msra.mxu0 %v171
    %205 = vmatprep.subr.mxu0 0.0
    %206 = vmatpush1.msra.mxu0 %v172
    %207 = vmatprep.subr.mxu0 0.0
    %208 = vmatpush1.msra.mxu0 %v173
    %209 = vmatprep.subr.mxu0 0.0
    %210 = vmatpush1.msra.mxu0 %v174
    %211 = vmatprep.subr.mxu0 0.0
    %212 = vmatpush1.msra.mxu0 0.0
    %213 = vmatprep.subr.mxu0 0.0
    %214 = vmatpush1.msra.mxu0 0.0
    %215 = vmatprep.subr.mxu0 0.0
    %216 = vmatpush1.msra.mxu0 0.0
    %217 = vmatprep.subr.mxu0 0.0
    %218 = vmatpush1.msra.mxu0 0.0
    %219 = vmatprep.subr.mxu0 0.0
    %220 = vmatpush1.msra.mxu0 0.0
    %221 = vmatprep.subr.mxu0 0.0
    %222 = vmatpush1.msra.mxu0 0.0
    %223 = vmatprep.subr.mxu0 0.0
    %224 = vmatpush1.msra.mxu0 0.0
    %225 = vmatprep.subr.mxu0 0.0
    %226 = vmatpush1.msra.mxu0 0.0
    %227 = vmatprep.subr.mxu0 0.0
    %228 = vmatpush1.msra.mxu0 0.0
    %229 = vmatprep.subr.mxu0 0.0
    %230 = vmatpush1.msra.mxu0 0.0
    %231 = vmatprep.subr.mxu0 0.0
    %232 = vmatpush1.msra.mxu0 0.0
    %233 = vmatprep.subr.mxu0 0.0
    %234 = vmatpush1.msra.mxu0 0.0
    %235 = vmatprep.subr.mxu0 0.0
    %236 = vmatpush1.msra.mxu0 0.0
    %237 = vmatprep.subr.mxu0 0.0
    %238 = vmatpush1.msra.mxu0 0.0
    %239 = vmatprep.subr.mxu0 0.0
    %240 = vmatpush1.msra.mxu0 0.0
    %241 = vmatprep.subr.mxu0 0.0
    %242 = vmatpush1.msra.mxu0 0.0
    %243 = vmatprep.mubr.f32.mxu0 0.0
    %244 = vmatmul.mubr.f32.gmra.mrb[0].mxu0 %v158
    %v245 = vpop.f32.mrb[0].mxu0
    %v246 = vadd.f32 %v178, %v245
    %v247 = vpop.f32.mrb[0].mxu0
    %248 = vdwg.mxu0
    %v249 = vmax.f32 %v246, 0.0
    %v250 = vld [vmem:[#allocation8] sm:$0xff]
    %v251 = vld [vmem:[#allocation8 + $0x8] sm:$0xff]
    %v252 = vld [vmem:[#allocation8 + $0x10] sm:$0xff]
    %v253 = vld [vmem:[#allocation8 + $0x18] sm:$0xff]
    %v254 = vld [vmem:[#allocation8 + $0x20] sm:$0xff]
    %v255 = vld [vmem:[#allocation8 + $0x28] sm:$0xff]
    %v256 = vld [vmem:[#allocation8 + $0x30] sm:$0xff]
    %v257 = vld [vmem:[#allocation8 + $0x38] sm:$0xff]
    %v258 = vld [vmem:[#allocation8 + $0x40] sm:$0xff]
    %v259 = vld [vmem:[#allocation8 + $0x48] sm:$0xff]
    %v260 = vld [vmem:[#allocation8 + $0x50] sm:$0xff]
    %v261 = vld [vmem:[#allocation8 + $0x58] sm:$0xff]
    %v262 = vld [vmem:[#allocation8 + $0x60] sm:$0xff]
    %v263 = vld [vmem:[#allocation8 + $0x68] sm:$0xff]
    %v264 = vld [vmem:[#allocation8 + $0x70] sm:$0xff]
    %v265 = vld [vmem:[#allocation8 + $0x78] sm:$0xff]
    %v266 = vlaneseq
    %v267 = vshrl.u32 %v266, 7
    %v268 = vsub.s32 0, %v267
    %v269 = vrot.slane %v76, %v268
    %270 = vmatprep.subr.mxu0 0.0
    %271 = vmatpush1.msra.mxu0 %v250
    %272 = vmatprep.subr.mxu0 0.0
    %273 = vmatpush1.msra.mxu0 %v251
    %274 = vmatprep.subr.mxu0 0.0
    %275 = vmatpush1.msra.mxu0 %v252
    %276 = vmatprep.subr.mxu0 0.0
    %277 = vmatpush1.msra.mxu0 %v253
    %278 = vmatprep.subr.mxu0 0.0
    %279 = vmatpush1.msra.mxu0 %v254
    %280 = vmatprep.subr.mxu0 0.0
    %281 = vmatpush1.msra.mxu0 %v255
    %282 = vmatprep.subr.mxu0 0.0
    %283 = vmatpush1.msra.mxu0 %v256
    %284 = vmatprep.subr.mxu0 0.0
    %285 = vmatpush1.msra.mxu0 %v257
    %286 = vmatprep.subr.mxu0 0.0
    %287 = vmatpush1.msra.mxu0 %v258
    %288 = vmatprep.subr.mxu0 0.0
    %289 = vmatpush1.msra.mxu0 %v259
    %290 = vmatprep.subr.mxu0 0.0
    %291 = vmatpush1.msra.mxu0 %v260
    %292 = vmatprep.subr.mxu0 0.0
    %293 = vmatpush1.msra.mxu0 %v261
    %294 = vmatprep.subr.mxu0 0.0
    %295 = vmatpush1.msra.mxu0 %v262
    %296 = vmatprep.subr.mxu0 0.0
    %297 = vmatpush1.msra.mxu0 %v263
    %298 = vmatprep.subr.mxu0 0.0
    %299 = vmatpush1.msra.mxu0 %v264
    %300 = vmatprep.subr.mxu0 0.0
    %301 = vmatpush1.msra.mxu0 %v265
    %302 = vmatprep.subr.mxu0 0.0
    %303 = vmatpush1.msra.mxu0 0.0
    %304 = vmatprep.subr.mxu0 0.0
    %305 = vmatpush1.msra.mxu0 0.0
    %306 = vmatprep.subr.mxu0 0.0
    %307 = vmatpush1.msra.mxu0 0.0
    %308 = vmatprep.subr.mxu0 0.0
    %309 = vmatpush1.msra.mxu0 0.0
    %310 = vmatprep.subr.mxu0 0.0
    %311 = vmatpush1.msra.mxu0 0.0
    %312 = vmatprep.subr.mxu0 0.0
    %313 = vmatpush1.msra.mxu0 0.0
    %314 = vmatprep.subr.mxu0 0.0
    %315 = vmatpush1.msra.mxu0 0.0
    %316 = vmatprep.subr.mxu0 0.0
    %317 = vmatpush1.msra.mxu0 0.0
    %318 = vmatprep.subr.mxu0 0.0
    %319 = vmatpush1.msra.mxu0 0.0
    %320 = vmatprep.subr.mxu0 0.0
    %321 = vmatpush1.msra.mxu0 0.0
    %322 = vmatprep.subr.mxu0 0.0
    %323 = vmatpush1.msra.mxu0 0.0
    %324 = vmatprep.subr.mxu0 0.0
    %325 = vmatpush1.msra.mxu0 0.0
    %326 = vmatprep.subr.mxu0 0.0
    %327 = vmatpush1.msra.mxu0 0.0
    %328 = vmatprep.subr.mxu0 0.0
    %329 = vmatpush1.msra.mxu0 0.0
    %330 = vmatprep.subr.mxu0 0.0
    %331 = vmatpush1.msra.mxu0 0.0
    %332 = vmatprep.subr.mxu0 0.0
    %333 = vmatpush1.msra.mxu0 0.0
    %334 = vmatprep.mubr.f32.mxu0 0.0
    %335 = vmatmul.mubr.f32.gmra.mrb[0].mxu0 %v249
    %v336 = vpop.f32.mrb[0].mxu0
    %v337 = vadd.f32 %v269, %v336
    %v338 = vpop.f32.mrb[0].mxu0
    %339 = vdwg.mxu0
    %340 = vst [vmem:[#allocation10] sm:$0xff] %v337
    // Predicated region
    $region38: #{dueling_q_forward.1} parent=1 // pred_check
      _
    $region39: #{dueling_q_forward.1} parent=1 // pred_check_branch
      %342 = sbr.rel (0) target = $region41
    $region40: #{dueling_q_forward.1} parent=1 // pred_region
      %s344 = ssub.s32 128, 128
      %345 = vsyncadd [#allocation4], %s344
      %s347 = sshll.u32 [#allocation10], 4
      %s348 = int_to_ptr.vmem [resolvable:$true] %s347
      %350 = dma.vmem_to_hbm [thread:$0]  %s348, 128, %s5, [#allocation4]
    $region41: #{dueling_q_forward.1} parent=1 // pred_fallthru
      _
    // Predicated region
    $region42: #{dueling_q_forward.1} parent=1 // pred_check
      _
    $region43: #{dueling_q_forward.1} parent=1 // pred_check_branch
      %352 = sbr.rel (0) target = $region45
    $region44: #{dueling_q_forward.1} parent=1 // pred_region
      %353 = dma.done [#allocation4], 128
    $region45: #{dueling_q_forward.1} parent=1 // pred_fallthru
      _
    %354 = vsyncpa [#allocation3], 1
    %355 = vsyncpa [#allocation6], 1
    %356 = vsyncpa [#allocation9], 1
    %357 = vsyncpa [#allocation4], 1

</llo_original>
